<compile_context>
chip_gen: v7x
topology: tpu7x:2x2x1
jax: 0.10.0
libtpu: 0.0.40
codegen_flags: <defaults>
</compile_context>

<pallas_src>
import math
import functools

import jax
import jax.numpy as jnp
from jax import lax
from jax.experimental import pallas as pl
from jax.experimental.pallas import tpu as pltpu


# ----------------------------------------------------------------------------- utils

def make_sinusoidal_pe(d_model, max_len=5000, dtype=jnp.float32):
    """Same math as the nn.Module __init__ (sinusoidal table, [max_len, d_model])."""
    assert d_model % 2 == 0, "d_model must be even (matches the PyTorch module)"
    position = jnp.arange(max_len, dtype=jnp.float32)[:, None]              # [max_len, 1]
    div_term = jnp.exp(
        jnp.arange(0, d_model, 2, dtype=jnp.float32) * -(math.log(10000.0) / d_model)
    )                                                                        # [D/2]
    pe = jnp.zeros((max_len, d_model), jnp.float32)
    pe = pe.at[:, 0::2].set(jnp.sin(position * div_term))
    pe = pe.at[:, 1::2].set(jnp.cos(position * div_term))
    return pe.astype(dtype)                                                  # [max_len, D]


def _i32(v):
    """Python int -> wrapped int32 value (for hash constants)."""
    v &= 0xFFFFFFFF
    return v - (1 << 32) if v >= (1 << 31) else v


_GOLDEN = _i32(0x9E3779B9)
_C1 = _i32(0x85EBCA6B)
_C2 = _i32(0xC2B2AE35)


def _fmix32(h):
    """murmur3 finalizer on int32 arrays: wrapping mul + logical shifts (VPU int ops)."""
    h = h ^ lax.shift_right_logical(h, 16)
    h = h * jnp.int32(_C1)
    h = h ^ lax.shift_right_logical(h, 13)
    h = h * jnp.int32(_C2)
    h = h ^ lax.shift_right_logical(h, 16)
    return h


def _tile_lanes(x, reps):
    """Tile a (rows, cols) block to (rows, reps*cols) with O(log reps) lane-concats."""
    if reps == 1:
        return x
    out = None
    chunk = x
    r = reps
    while r:
        if r & 1:
            out = chunk if out is None else jnp.concatenate([out, chunk], axis=-1)
        r >>= 1
        if r:
            chunk = jnp.concatenate([chunk, chunk], axis=-1)
    return out


def _choose_block_t(T, row_bytes, vmem_budget_bytes):
    """Largest block_t (divisor of T, multiple of 8) whose pipelined tiles fit budget."""
    if T * row_bytes <= vmem_budget_bytes:
        return T
    best = None
    for bt in range(8, T, 8):
        if T % bt == 0 and bt * row_bytes <= vmem_budget_bytes:
            best = bt
    if best is not None:
        return best
    # nothing fits: fall back to the smallest multiple-of-8 divisor (or T itself)
    for bt in range(8, T, 8):
        if T % bt == 0:
            return bt
    return T


# ---------------------------------------------------------------------------- kernel

def _pe_kernel(seed_ref, x_ref, pe_ref, o_ref, *, p, train, batch):
    # x_ref/o_ref blocks: (block_t, batch*D)   pe_ref block: (block_t, D)
    pe_full = _tile_lanes(pe_ref[...], batch)          # broadcast pe over batch (lanes)
    y = x_ref[...] + pe_full                            # VPU broadcast-add, lane-dense

    if train and p > 0.0:
        bt, w = y.shape
        t0 = pl.program_id(0) * bt
        row = lax.broadcasted_iota(jnp.int32, (bt, w), 0) + t0
        col = lax.broadcasted_iota(jnp.int32, (bt, w), 1)
        # absolute element index -> keep-mask is independent of block_t / grid sharding
        idx = row * jnp.int32(w) + col
        h = idx + seed_ref[0] * jnp.int32(_GOLDEN)
        bits = _fmix32(h) & jnp.int32(0x7FFFFFFF)       # 31 uniform bits, sign-safe compare
        thresh = jnp.int32(min(int(round(p * (1 << 31))), (1 << 31) - 1))
        keep = bits >= thresh                           # P(keep) = 1 - p
        scale = jnp.asarray(1.0 / (1.0 - p), dtype=y.dtype)
        y = jnp.where(keep, y * scale, jnp.zeros_like(y))

    o_ref[...] = y.astype(o_ref.dtype)


# --------------------------------------------------------------------------- wrapper

def positional_encoding(x, pe, *, p=0.1, train=False, seed=0, block_t=None,
                        vmem_budget_bytes=8 * 1024 * 1024):
    """x: [T, B, D]; pe: [max_len, D] sinusoidal table. Returns dropout(x + pe[:T])."""
    T, B, D = x.shape
    max_len, Dp = pe.shape
    assert Dp == D and T <= max_len
    if train:
        assert 0.0 <= p < 1.0, "dropout p must be in [0, 1)"

    itemsize = jnp.dtype(x.dtype).itemsize

    # Lane-dense 2-D views: x/out as [T, B*D] (contiguous -> free reshape), pe as [T, D]
    # cast once to the activation dtype (no per-element converts in the hot loop).
    x2 = x.reshape(T, B * D)
    pe_t = pe[:T].astype(x.dtype)

    if block_t is None:
        # bytes resident per grid step: x + out + pe tiles, each double-buffered.
        row_bytes = 2 * (2 * B * D + D) * itemsize
        block_t = _choose_block_t(T, row_bytes, vmem_budget_bytes)
    assert T % block_t == 0
    grid = (T // block_t,)

    kernel = functools.partial(_pe_kernel, p=float(p), train=bool(train), batch=B)
    seed_arr = jnp.asarray([seed], dtype=jnp.int32)

    out2 = pl.pallas_call(
        kernel,
        out_shape=jax.ShapeDtypeStruct((T, B * D), x.dtype),
        grid_spec=pltpu.PrefetchScalarGridSpec(
            num_scalar_prefetch=1,                     # seed scalar lands in SMEM
            grid=grid,
            in_specs=[
                pl.BlockSpec((block_t, B * D), lambda i, seed: (i, 0)),   # x tile
                pl.BlockSpec((block_t, D), lambda i, seed: (i, 0)),       # pe rows
            ],
            out_specs=pl.BlockSpec((block_t, B * D), lambda i, seed: (i, 0)),
        ),
        compiler_params=pltpu.CompilerParams(
            # independent output blocks, no carried state -> shards across v7x's 2 TCs
            dimension_semantics=("parallel",),
        ),
    )(seed_arr, x2, pe_t)

    return out2.reshape(T, B, D)


# ------------------------------------------------------------------------------ main

if __name__ == "__main__":
    # small shapes consistent with the module: x : [T, B, d_model]
    T, B, D = 8, 2, 32
    max_len = 5000
    dropout_p = 0.1

    key = jax.random.PRNGKey(0)
    x = jax.random.normal(key, (T, B, D), dtype=jnp.float32)
    pe = make_sinusoidal_pe(D, max_len=max_len, dtype=x.dtype)

    ref = x + pe[:T][:, None, :]

    # eval mode (dropout = identity): deterministic, check against reference
    out = positional_encoding(x, pe, p=dropout_p, train=False)
    out = jax.block_until_ready(out)
    assert out.shape == (T, B, D) and out.dtype == x.dtype
    assert jnp.allclose(out, ref, atol=1e-6, rtol=1e-6)

    # train mode (in-kernel hash-PRNG inverted dropout)
    out_tr = positional_encoding(x, pe, p=dropout_p, train=True, seed=123)
    out_tr = jax.block_until_ready(out_tr)
    assert out_tr.shape == (T, B, D) and out_tr.dtype == x.dtype
    # kept elements must equal ref / (1 - p); dropped elements are exactly 0
    scale = 1.0 / (1.0 - dropout_p)
    kept = out_tr != 0
    err = jnp.where(kept, out_tr - ref * scale, 0.0)
    assert jnp.allclose(err, 0.0, atol=1e-5)
    keep_frac = float(jnp.mean(kept.astype(jnp.float32)))
    assert 0.6 < keep_frac <= 1.0

    print("KERNEL_OK")
</pallas_src>

<mosaic_0001>
module attributes {stable_mosaic.version = 11 : i64} {
  func.func @_pe_kernel(%arg0: i32, %arg1: memref<1xi32, #tpu.memory_space<smem>>, %arg2: memref<8x64xf32, #tpu.memory_space<vmem>>, %arg3: memref<8x32xf32, #tpu.memory_space<vmem>>, %arg4: memref<8x64xf32, #tpu.memory_space<vmem>>) attributes {dimension_semantics = [#tpu.dimension_semantics<parallel>], iteration_bounds = array<i64: 1>, scalar_prefetch = 1 : i64, scratch_operands = 0 : i64, tpu.core_type = #tpu.core_type<tc>, window_params = [{transform_indices = @transform_0, window_bounds = array<i64: 8, 64>}, {transform_indices = @transform_1, window_bounds = array<i64: 8, 32>}, {transform_indices = @transform_2, window_bounds = array<i64: 8, 64>}]} {
    %c0 = arith.constant 0 : index
    %c0_0 = arith.constant 0 : index
    %0 = vector.load %arg3[%c0, %c0_0] : memref<8x32xf32, #tpu.memory_space<vmem>>, vector<8x32xf32>
    %1 = tpu.concatenate %0, %0 in 1 : vector<8x32xf32>, vector<8x32xf32> -> vector<8x64xf32>
    %c0_1 = arith.constant 0 : index
    %c0_2 = arith.constant 0 : index
    %2 = vector.load %arg2[%c0_1, %c0_2] : memref<8x64xf32, #tpu.memory_space<vmem>>, vector<8x64xf32>
    %3 = arith.addf %2, %1 : vector<8x64xf32>
    %c0_3 = arith.constant 0 : index
    %c0_4 = arith.constant 0 : index
    %4 = vector.load %arg4[%c0_3, %c0_4] : memref<8x64xf32, #tpu.memory_space<vmem>>, vector<8x64xf32>
    tpu.vector_store %arg4[%c0_3, %c0_4], %3 {strides = array<i32>} : memref<8x64xf32, #tpu.memory_space<vmem>>, vector<8x64xf32>,
    return
  }
  func.func @transform_0(%arg0: i32, %arg1: memref<1xi32, #tpu.memory_space<smem>>) -> (i32, i32) {
    %c0_i32 = arith.constant 0 : i32
    %c0_i32_0 = arith.constant 0 : i32
    return %arg0, %c0_i32 : i32, i32
  }
  func.func @transform_1(%arg0: i32, %arg1: memref<1xi32, #tpu.memory_space<smem>>) -> (i32, i32) {
    %c0_i32 = arith.constant 0 : i32
    %c0_i32_0 = arith.constant 0 : i32
    return %arg0, %c0_i32 : i32, i32
  }
  func.func @transform_2(%arg0: i32, %arg1: memref<1xi32, #tpu.memory_space<smem>>) -> (i32, i32) {
    %c0_i32 = arith.constant 0 : i32
    %c0_i32_0 = arith.constant 0 : i32
    return %arg0, %c0_i32 : i32, i32
  }
}

</mosaic_0001>

<llo_original>
// kernel: tpu_custom_call.1
$region0: #{tpu_custom_call.1}
  #allocation0 [shape = 'u32[]', space=smem, size = 0x4, offset = 0x4, fixed_abs, tag = 'smem constant byte address 0x4 - core index']
  #allocation1 [shape = 'u32[144,128]{1,0:T(1,128)}', space=vmem, size = 0x12000, scoped, tag = 'internal scratch']
  #allocation2 [shape = 's32[1]{0}', space=sflag, size = 0x4, scoped, tag = 'scoped memory for tpu_custom_call.1']
  #allocation3 [shape = 's32[1]{0:T(128)S(6)}', space=smem, size = 0x200, scoped, tag = 'prefetched SMEM operand 0']
  %s0 = inlined_call_operand.<no memory space> [shape: s32[1], index: 0, kind: input, shape index: {}]
  %s1 = inlined_call_operand.hbm [shape: f32[8,64], index: 1, kind: input, shape index: {}]
  %s2 = inlined_call_operand.hbm [shape: f32[8,32], index: 2, kind: input, shape index: {}]
  %s3 = inlined_call_operand.hbm [shape: f32[8,64], index: 3, kind: output, shape index: {}]
  %s4 = sld [smem:[#allocation0]]
  $region26: #{tpu_custom_call.1} parent=0
    _
  %s6 = ssub.s32 1, %s4
  %s7 = scalar_select 0, %s6, %s4
  %8 = sst [smem:[#allocation3]] %s0
  $region1: #{tpu_custom_call.1} parent=0
    #allocation4 [shape = 'u8[4096]{0}', space=vmem, size = 0x1000, scoped, tag = 'input window, operand 1, single buffered']
    #allocation5 [shape = 's32[1]{0}', space=sflag, size = 0x4, scoped, tag = 'scoped memory for tpu_custom_call.1']
    #allocation6 [shape = 's32[1]{0}', space=sflag, size = 0x4, scoped, tag = 'scoped memory for tpu_custom_call.1']
    #allocation7 [shape = 'u8[4096]{0}', space=vmem, size = 0x1000, scoped, tag = 'input window, operand 2, single buffered']
    #allocation8 [shape = 's32[1]{0}', space=sflag, size = 0x4, scoped, tag = 'scoped memory for tpu_custom_call.1']
    #allocation9 [shape = 'u8[4096]{0}', space=vmem, size = 0x1000, scoped, tag = 'output window, operand 0, single buffered']
    %9 = vsyncpa [#allocation5], 0
    %10 = vsyncpa [#allocation8], 0
    %11 = vsyncpa [#allocation6], 0
    // Predicated region
    $region2: #{tpu_custom_call.1} parent=1 // pred_check
      _
    $region3: #{tpu_custom_call.1} parent=1 // pred_check_branch
      %13 = sbr.rel (0) target = $region5
    $region4: #{tpu_custom_call.1} parent=1 // pred_region
      %s15 = ssub.s32 128, 128
      %16 = vsyncadd [#allocation5], %s15
      %s18 = sshll.u32 [#allocation4], 4
      %s19 = int_to_ptr.vmem [resolvable:$true] %s18
      %21 = dma.hbm_to_vmem [thread:$0]  %s1, 128, %s19, [#allocation5]
    $region5: #{tpu_custom_call.1} parent=1 // pred_fallthru
      _
    // Predicated region
    $region6: #{tpu_custom_call.1} parent=1 // pred_check
      _
    $region7: #{tpu_custom_call.1} parent=1 // pred_check_branch
      %23 = sbr.rel (0) target = $region9
    $region8: #{tpu_custom_call.1} parent=1 // pred_region
      %s25 = ssub.s32 128, 128
      %26 = vsyncadd [#allocation8], %s25
      %s28 = sshll.u32 [#allocation7], 4
      %s29 = int_to_ptr.vmem [resolvable:$true] %s28
      %31 = dma.hbm_to_vmem [thread:$0]  %s2, 128, %s29, [#allocation8]
    $region9: #{tpu_custom_call.1} parent=1 // pred_fallthru
      _
    // Predicated region
    $region10: #{tpu_custom_call.1} parent=1 // pred_check
      _
    $region11: #{tpu_custom_call.1} parent=1 // pred_check_branch
      %33 = sbr.rel (0) target = $region13
    $region12: #{tpu_custom_call.1} parent=1 // pred_region
      %34 = dma.done [#allocation5], 128
    $region13: #{tpu_custom_call.1} parent=1 // pred_fallthru
      _
    // Predicated region
    $region14: #{tpu_custom_call.1} parent=1 // pred_check
      _
    $region15: #{tpu_custom_call.1} parent=1 // pred_check_branch
      %36 = sbr.rel (0) target = $region17
    $region16: #{tpu_custom_call.1} parent=1 // pred_region
      %37 = dma.done [#allocation8], 128
    $region17: #{tpu_custom_call.1} parent=1 // pred_fallthru
      _
    %v38 = vld [vmem:[#allocation7] sm:$0xff]
    %40 = vrot.lane.b32.xlu0 %v38, 32
    %v41 = vpop.permute.xlu0 %40
    %vm43 = vcmask 261120
    %v44 = vsel %vm43, %v38, %v41
    %v45 = vld [vmem:[#allocation4] sm:$0xff]
    %v46 = vadd.f32 %v45, %v44
    %vm47 = vcmask 523264
    %48 = vst.msk [vmem:[#allocation9] sm:$0xff] %vm47, %v46
    // Predicated region
    $region18: #{tpu_custom_call.1} parent=1 // pred_check
      _
    $region19: #{tpu_custom_call.1} parent=1 // pred_check_branch
      %50 = sbr.rel (0) target = $region21
    $region20: #{tpu_custom_call.1} parent=1 // pred_region
      %s52 = ssub.s32 128, 128
      %53 = vsyncadd [#allocation6], %s52
      %s55 = sshll.u32 [#allocation9], 4
      %s56 = int_to_ptr.vmem [resolvable:$true] %s55
      %58 = dma.vmem_to_hbm [thread:$0]  %s56, 128, %s3, [#allocation6]
    $region21: #{tpu_custom_call.1} parent=1 // pred_fallthru
      _
    // Predicated region
    $region22: #{tpu_custom_call.1} parent=1 // pred_check
      _
    $region23: #{tpu_custom_call.1} parent=1 // pred_check_branch
      %60 = sbr.rel (0) target = $region25
    $region24: #{tpu_custom_call.1} parent=1 // pred_region
      %61 = dma.done [#allocation6], 128
    $region25: #{tpu_custom_call.1} parent=1 // pred_fallthru
      _
    %62 = vsyncpa [#allocation5], 1
    %63 = vsyncpa [#allocation8], 1
    %64 = vsyncpa [#allocation6], 1

</llo_original>
